<compile_context>
chip_gen: v7x
topology: tpu7x:2x2x1
jax: 0.10.0
libtpu: 0.0.40
codegen_flags: <defaults>
</compile_context>

<pallas_src>
import functools
import math

import numpy as np
import jax
import jax.numpy as jnp
from jax.experimental import pallas as pl
from jax.experimental.pallas import tpu as pltpu


# ----------------------------------------------------------------------------
# Gaussian window identical (up to float precision) to create_kernel(dim=2):
# MultivariateNormal(mu=[ws//2]*2, cov=1.5*I) factorizes exactly, so the
# normalized 2D window equals outer(g, g) with the normalized 1D g below.
# ----------------------------------------------------------------------------
def _gauss_1d(window_size: int) -> np.ndarray:
    mu = float(window_size) // 2      # 5.0 for window_size=11 (matches torch)
    var = 1.5                          # covariance (NOT std) in the reference
    x = np.arange(window_size, dtype=np.float64)
    g = np.exp(-((x - mu) ** 2) / (2.0 * var))
    return g / g.sum()


def _banded(n: int, g1d: np.ndarray) -> np.ndarray:
    """(n, n) matrix M with M[i, j] = g[j - i + pad]; M @ x == 1D 'same' conv."""
    ws = g1d.shape[0]
    pad = ws // 2
    m = np.zeros((n, n), np.float64)
    for i in range(n):
        for j in range(max(0, i - pad), min(n, i + pad + 1)):
            m[i, j] = g1d[j - i + pad]
    return m


# ----------------------------------------------------------------------------
# Pallas kernel
# ----------------------------------------------------------------------------
def _make_ssim_kernel():
    C1 = 0.01 ** 2
    C2 = 0.03 ** 2

    def kernel(x1_ref, x2_ref, ah_ref, awbd_ref, out_ref):
        a = x1_ref[...]                   # (H, K*W) f32, K channels lane-packed
        b = x2_ref[...]
        ah = ah_ref[...]                  # (H, H)      vertical banded filter
        aw = awbd_ref[...]                # (K*W, K*W)  block-diag lane filter

        def gfilt(q):
            # Separable Gaussian blur as two MXU matmuls; the banded matrices
            # already encode the zero "same" padding at the borders.
            qh = jnp.dot(q, aw, preferred_element_type=jnp.float32)
            return jnp.dot(ah, qh, preferred_element_type=jnp.float32)

        mu1 = gfilt(a)
        mu2 = gfilt(b)
        s11 = gfilt(a * a)
        s22 = gfilt(b * b)
        s12 = gfilt(a * b)

        mu1_sq = mu1 * mu1
        mu2_sq = mu2 * mu2
        mu1_mu2 = mu1 * mu2
        sigma1_sq = s11 - mu1_sq
        sigma2_sq = s22 - mu2_sq
        sigma12 = s12 - mu1_mu2

        ssim_map = ((2.0 * mu1_mu2 + C1) * (2.0 * sigma12 + C2)) / \
                   ((mu1_sq + mu2_sq + C1) * (sigma1_sq + sigma2_sq + C2))

        # One partial sum per grid step; cross-step reduction happens in the
        # wrapper so the grid stays "parallel".  The (8, 128) output block is
        # always layout-legal regardless of the number of grid steps.
        partial = jnp.sum(ssim_map, keepdims=True)          # (1, 1)
        out_ref[...] = jnp.broadcast_to(partial, (8, 128)).astype(jnp.float32)

    return kernel


# ----------------------------------------------------------------------------
# Wrapper (equivalent of SSIM.forward with size_average=True)
# ----------------------------------------------------------------------------
@functools.partial(jax.jit, static_argnames=("window_size",))
def ssim_pallas(img1, img2, window_size: int = 11):
    assert img1.shape == img2.shape and img1.ndim == 4    # NCHW
    B, C, H, W = img1.shape
    BC = B * C
    g1d = _gauss_1d(window_size)

    # Lane packing: pack K channel slices along the lane axis so that the
    # block's last dim K*W is a multiple of 128 (lane-dense, layout-legal).
    K = 128 // math.gcd(W, 128)
    while K * W < 512 and 2 * K <= BC and 2 * K * W * H * 4 <= (2 << 20):
        K *= 2
    BC_pad = -(-BC // K) * K           # pad channel count up to a multiple of K
    num_blocks = BC_pad // K
    KW = K * W

    # Banded filter matrices (compile-time constants, f32).
    ah = jnp.asarray(_banded(H, g1d).astype(np.float32))          # (H, H)
    aw_lane = _banded(W, g1d).T                                    # (W, W)
    awbd_np = np.zeros((KW, KW), np.float32)
    for c in range(K):
        awbd_np[c * W:(c + 1) * W, c * W:(c + 1) * W] = aw_lane
    awbd = jnp.asarray(awbd_np)                                    # (KW, KW)

    def pack(x):
        x = x.astype(jnp.float32).reshape(BC, H, W)
        if BC_pad != BC:
            x = jnp.concatenate(
                [x, jnp.zeros((BC_pad - BC, H, W), jnp.float32)], axis=0)
        # (BC_pad, H, W) -> (H, BC_pad * W): channel c occupies lanes
        # [c*W, (c+1)*W), matching the block-diagonal lane filter.
        return jnp.transpose(x, (1, 0, 2)).reshape(H, BC_pad * W)

    x1p = pack(img1)
    x2p = pack(img2)

    partials = pl.pallas_call(
        _make_ssim_kernel(),
        out_shape=jax.ShapeDtypeStruct((num_blocks * 8, 128), jnp.float32),
        grid_spec=pltpu.PrefetchScalarGridSpec(
            num_scalar_prefetch=0,
            grid=(num_blocks,),
            in_specs=[
                pl.BlockSpec((H, KW), lambda i: (0, i)),
                pl.BlockSpec((H, KW), lambda i: (0, i)),
                pl.BlockSpec((H, H), lambda i: (0, 0)),
                pl.BlockSpec((KW, KW), lambda i: (0, 0)),
            ],
            out_specs=pl.BlockSpec((8, 128), lambda i: (i, 0)),
        ),
        compiler_params=pltpu.CompilerParams(
            dimension_semantics=("parallel",)),
    )(x1p, x2p, ah, awbd)

    # Each padded (all-zero) fake channel has ssim_map == 1 everywhere and thus
    # contributes exactly H*W to the total; subtract it out.
    total = jnp.sum(partials[0::8, 0]) - float((BC_pad - BC) * H * W)
    # size_average=True -> global mean of the SSIM map.
    return total / float(BC * H * W)


# ----------------------------------------------------------------------------
# Pure-JAX reference (mirrors the PyTorch _ssim) for the correctness check.
# ----------------------------------------------------------------------------
def ssim_ref(img1, img2, window_size: int = 11):
    B, C, H, W = img1.shape
    pad = window_size // 2
    g = _gauss_1d(window_size)
    w2d = jnp.asarray(np.outer(g, g).astype(np.float32))
    w = jnp.broadcast_to(w2d, (C, 1, window_size, window_size))

    def conv(x):
        return jax.lax.conv_general_dilated(
            x, w, window_strides=(1, 1), padding=[(pad, pad), (pad, pad)],
            dimension_numbers=("NCHW", "OIHW", "NCHW"), feature_group_count=C,
            precision=jax.lax.Precision.HIGHEST)

    mu1, mu2 = conv(img1), conv(img2)
    mu1_sq, mu2_sq, mu1_mu2 = mu1 * mu1, mu2 * mu2, mu1 * mu2
    sigma1_sq = conv(img1 * img1) - mu1_sq
    sigma2_sq = conv(img2 * img2) - mu2_sq
    sigma12 = conv(img1 * img2) - mu1_mu2
    C1, C2 = 0.01 ** 2, 0.03 ** 2
    ssim_map = ((2 * mu1_mu2 + C1) * (2 * sigma12 + C2)) / \
               ((mu1_sq + mu2_sq + C1) * (sigma1_sq + sigma2_sq + C2))
    return jnp.mean(ssim_map)


if __name__ == "__main__":
    key = jax.random.PRNGKey(0)
    k1, k2 = jax.random.split(key)
    B, C, H, W = 2, 4, 16, 16                     # SSIM(channel=4, dim=2)
    img1 = jax.random.uniform(k1, (B, C, H, W), dtype=jnp.float32)
    img2 = jax.random.uniform(k2, (B, C, H, W), dtype=jnp.float32)

    out = jax.block_until_ready(ssim_pallas(img1, img2, window_size=11))
    ref = jax.block_until_ready(ssim_ref(img1, img2, window_size=11))

    assert np.allclose(np.asarray(out), np.asarray(ref), rtol=1e-4, atol=3e-5), \
        (float(out), float(ref))

    print("KERNEL_OK")
</pallas_src>

<mosaic_0001>
module attributes {stable_mosaic.version = 11 : i64} {
  func.func @kernel(%arg0: i32, %arg1: memref<16x128xf32, #tpu.memory_space<vmem>>, %arg2: memref<16x128xf32, #tpu.memory_space<vmem>>, %arg3: memref<16x16xf32, #tpu.memory_space<vmem>>, %arg4: memref<128x128xf32, #tpu.memory_space<vmem>>, %arg5: memref<8x128xf32, #tpu.memory_space<vmem>>) attributes {dimension_semantics = [#tpu.dimension_semantics<parallel>], iteration_bounds = array<i64: 1>, scalar_prefetch = 0 : i64, scratch_operands = 0 : i64, tpu.core_type = #tpu.core_type<tc>, window_params = [{transform_indices = @transform_0, window_bounds = array<i64: 16, 128>}, {transform_indices = @transform_1, window_bounds = array<i64: 16, 128>}, {pipeline_mode = #tpu.pipeline_mode<synchronous>, transform_indices = @transform_2, window_bounds = array<i64: 16, 16>}, {pipeline_mode = #tpu.pipeline_mode<synchronous>, transform_indices = @transform_3, window_bounds = array<i64: 128, 128>}, {transform_indices = @transform_4, window_bounds = array<i64: 8, 128>}]} {
    %c0 = arith.constant 0 : index
    %c0_0 = arith.constant 0 : index
    %0 = vector.load %arg1[%c0, %c0_0] : memref<16x128xf32, #tpu.memory_space<vmem>>, vector<16x128xf32>
    %c0_1 = arith.constant 0 : index
    %c0_2 = arith.constant 0 : index
    %1 = vector.load %arg2[%c0_1, %c0_2] : memref<16x128xf32, #tpu.memory_space<vmem>>, vector<16x128xf32>
    %c0_3 = arith.constant 0 : index
    %c0_4 = arith.constant 0 : index
    %2 = vector.load %arg3[%c0_3, %c0_4] : memref<16x16xf32, #tpu.memory_space<vmem>>, vector<16x16xf32>
    %c0_5 = arith.constant 0 : index
    %c0_6 = arith.constant 0 : index
    %3 = vector.load %arg4[%c0_5, %c0_6] : memref<128x128xf32, #tpu.memory_space<vmem>>, vector<128x128xf32>
    %cst = arith.constant dense<0.000000e+00> : vector<16x128xf32>
    %4 = tpu.matmul %0, %3, %cst {dimension_numbers = #tpu.dot_dimension_numbers<[1], [0], [0], [1], [0, 0, 1, 1], [], []>} : vector<16x128xf32>, vector<128x128xf32>, vector<16x128xf32> -> vector<16x128xf32>
    %cst_7 = arith.constant dense<0.000000e+00> : vector<16x128xf32>
    %5 = tpu.matmul %2, %4, %cst_7 {dimension_numbers = #tpu.dot_dimension_numbers<[1], [0], [0], [1], [0, 0, 1, 1], [], []>} : vector<16x16xf32>, vector<16x128xf32>, vector<16x128xf32> -> vector<16x128xf32>
    %cst_8 = arith.constant dense<0.000000e+00> : vector<16x128xf32>
    %6 = tpu.matmul %1, %3, %cst_8 {dimension_numbers = #tpu.dot_dimension_numbers<[1], [0], [0], [1], [0, 0, 1, 1], [], []>} : vector<16x128xf32>, vector<128x128xf32>, vector<16x128xf32> -> vector<16x128xf32>
    %cst_9 = arith.constant dense<0.000000e+00> : vector<16x128xf32>
    %7 = tpu.matmul %2, %6, %cst_9 {dimension_numbers = #tpu.dot_dimension_numbers<[1], [0], [0], [1], [0, 0, 1, 1], [], []>} : vector<16x16xf32>, vector<16x128xf32>, vector<16x128xf32> -> vector<16x128xf32>
    %8 = arith.mulf %0, %0 : vector<16x128xf32>
    %cst_10 = arith.constant dense<0.000000e+00> : vector<16x128xf32>
    %9 = tpu.matmul %8, %3, %cst_10 {dimension_numbers = #tpu.dot_dimension_numbers<[1], [0], [0], [1], [0, 0, 1, 1], [], []>} : vector<16x128xf32>, vector<128x128xf32>, vector<16x128xf32> -> vector<16x128xf32>
    %cst_11 = arith.constant dense<0.000000e+00> : vector<16x128xf32>
    %10 = tpu.matmul %2, %9, %cst_11 {dimension_numbers = #tpu.dot_dimension_numbers<[1], [0], [0], [1], [0, 0, 1, 1], [], []>} : vector<16x16xf32>, vector<16x128xf32>, vector<16x128xf32> -> vector<16x128xf32>
    %11 = arith.mulf %1, %1 : vector<16x128xf32>
    %cst_12 = arith.constant dense<0.000000e+00> : vector<16x128xf32>
    %12 = tpu.matmul %11, %3, %cst_12 {dimension_numbers = #tpu.dot_dimension_numbers<[1], [0], [0], [1], [0, 0, 1, 1], [], []>} : vector<16x128xf32>, vector<128x128xf32>, vector<16x128xf32> -> vector<16x128xf32>
    %cst_13 = arith.constant dense<0.000000e+00> : vector<16x128xf32>
    %13 = tpu.matmul %2, %12, %cst_13 {dimension_numbers = #tpu.dot_dimension_numbers<[1], [0], [0], [1], [0, 0, 1, 1], [], []>} : vector<16x16xf32>, vector<16x128xf32>, vector<16x128xf32> -> vector<16x128xf32>
    %14 = arith.mulf %0, %1 : vector<16x128xf32>
    %cst_14 = arith.constant dense<0.000000e+00> : vector<16x128xf32>
    %15 = tpu.matmul %14, %3, %cst_14 {dimension_numbers = #tpu.dot_dimension_numbers<[1], [0], [0], [1], [0, 0, 1, 1], [], []>} : vector<16x128xf32>, vector<128x128xf32>, vector<16x128xf32> -> vector<16x128xf32>
    %cst_15 = arith.constant dense<0.000000e+00> : vector<16x128xf32>
    %16 = tpu.matmul %2, %15, %cst_15 {dimension_numbers = #tpu.dot_dimension_numbers<[1], [0], [0], [1], [0, 0, 1, 1], [], []>} : vector<16x16xf32>, vector<16x128xf32>, vector<16x128xf32> -> vector<16x128xf32>
    %17 = arith.mulf %5, %5 : vector<16x128xf32>
    %18 = arith.mulf %7, %7 : vector<16x128xf32>
    %19 = arith.mulf %5, %7 : vector<16x128xf32>
    %20 = arith.subf %10, %17 : vector<16x128xf32>
    %21 = arith.subf %13, %18 : vector<16x128xf32>
    %22 = arith.subf %16, %19 : vector<16x128xf32>
    %cst_16 = arith.constant 2.000000e+00 : f32
    %23 = vector.broadcast %cst_16 : f32 to vector<16x128xf32>
    %24 = arith.mulf %23, %19 : vector<16x128xf32>
    %cst_17 = arith.constant 9.99999974E-5 : f32
    %25 = vector.broadcast %cst_17 : f32 to vector<16x128xf32>
    %26 = arith.addf %24, %25 : vector<16x128xf32>
    %cst_18 = arith.constant 2.000000e+00 : f32
    %27 = vector.broadcast %cst_18 : f32 to vector<16x128xf32>
    %28 = arith.mulf %27, %22 : vector<16x128xf32>
    %cst_19 = arith.constant 8.99999984E-4 : f32
    %29 = vector.broadcast %cst_19 : f32 to vector<16x128xf32>
    %30 = arith.addf %28, %29 : vector<16x128xf32>
    %31 = arith.mulf %26, %30 : vector<16x128xf32>
    %32 = arith.addf %17, %18 : vector<16x128xf32>
    %cst_20 = arith.constant 9.99999974E-5 : f32
    %33 = vector.broadcast %cst_20 : f32 to vector<16x128xf32>
    %34 = arith.addf %32, %33 : vector<16x128xf32>
    %35 = arith.addf %20, %21 : vector<16x128xf32>
    %cst_21 = arith.constant 8.99999984E-4 : f32
    %36 = vector.broadcast %cst_21 : f32 to vector<16x128xf32>
    %37 = arith.addf %35, %36 : vector<16x128xf32>
    %38 = arith.mulf %34, %37 : vector<16x128xf32>
    %39 = arith.divf %31, %38 : vector<16x128xf32>
    %40 = vector.shape_cast %39 : vector<16x128xf32> to vector<1x16x128xf32>
    %cst_22 = arith.constant dense<0.000000e+00> : vector<1xf32>
    %41 = vector.multi_reduction <add>, %40, %cst_22 [1, 2] : vector<1x16x128xf32> to vector<1xf32>
    %42 = vector.shape_cast %41 : vector<1xf32> to vector<1x1x1xf32>
    %43 = vector.extract %42[0, 0, 0] : f32 from vector<1x1x1xf32>
    %44 = vector.broadcast %43 : f32 to vector<1x1xf32>
    %45 = vector.shape_cast %44 : vector<1x1xf32> to vector<1x1xf32>
    %46 = vector.broadcast %45 : vector<1x1xf32> to vector<8x128xf32>
    %c0_23 = arith.constant 0 : index
    %c0_24 = arith.constant 0 : index
    %47 = vector.load %arg5[%c0_23, %c0_24] : memref<8x128xf32, #tpu.memory_space<vmem>>, vector<8x128xf32>
    tpu.vector_store %arg5[%c0_23, %c0_24], %46 {strides = array<i32>} : memref<8x128xf32, #tpu.memory_space<vmem>>, vector<8x128xf32>,
    return
  }
  func.func @transform_0(%arg0: i32) -> (i32, i32) {
    %c0_i32 = arith.constant 0 : i32
    %c0_i32_0 = arith.constant 0 : i32
    return %c0_i32, %arg0 : i32, i32
  }
  func.func @transform_1(%arg0: i32) -> (i32, i32) {
    %c0_i32 = arith.constant 0 : i32
    %c0_i32_0 = arith.constant 0 : i32
    return %c0_i32, %arg0 : i32, i32
  }
  func.func @transform_2(%arg0: i32) -> (i32, i32) {
    %c0_i32 = arith.constant 0 : i32
    %c0_i32_0 = arith.constant 0 : i32
    %c0_i32_1 = arith.constant 0 : i32
    return %c0_i32, %c0_i32_0 : i32, i32
  }
  func.func @transform_3(%arg0: i32) -> (i32, i32) {
    %c0_i32 = arith.constant 0 : i32
    %c0_i32_0 = arith.constant 0 : i32
    %c0_i32_1 = arith.constant 0 : i32
    return %c0_i32, %c0_i32_0 : i32, i32
  }
  func.func @transform_4(%arg0: i32) -> (i32, i32) {
    %c0_i32 = arith.constant 0 : i32
    %c0_i32_0 = arith.constant 0 : i32
    return %arg0, %c0_i32 : i32, i32
  }
}

</mosaic_0001>

<llo_original>
// kernel: ssim_pallas.1
$region0: #{ssim_pallas.1}
  #allocation0 [shape = 'u32[]', space=smem, size = 0x4, offset = 0x4, fixed_abs, tag = 'smem constant byte address 0x4 - core index']
  #allocation1 [shape = 'u32[144,128]{1,0:T(1,128)}', space=vmem, size = 0x12000, scoped, tag = 'internal scratch']
  %s0 = inlined_call_operand.vmem [shape: f32[16,128], index: 0, kind: input, shape index: {}]
  %s1 = inlined_call_operand.vmem [shape: f32[16,128], index: 1, kind: input, shape index: {}]
  %s2 = inlined_call_operand.vmem [shape: f32[16,16], index: 2, kind: input, shape index: {}]
  %s3 = inlined_call_operand.vmem [shape: f32[128,128], index: 3, kind: input, shape index: {}]
  %s4 = inlined_call_operand.vmem [shape: f32[8,128], index: 4, kind: output, shape index: {}]
  %s5 = sld [smem:[#allocation0]]
  $region26: #{ssim_pallas.1} parent=0
    _
  %s7 = ssub.s32 1, %s5
  %s8 = scalar_select 0, %s7, %s5
  // Predicated region
  $region2: #{ssim_pallas.1} parent=0 // pred_check
    _
  $region3: #{ssim_pallas.1} parent=0 // pred_check_branch
    %10 = sbr.rel (0) target = $region5
  $region4: #{ssim_pallas.1} parent=0 // pred_region
    _
  $region5: #{ssim_pallas.1} parent=0 // pred_fallthru
    _
  // Predicated region
  $region6: #{ssim_pallas.1} parent=0 // pred_check
    _
  $region7: #{ssim_pallas.1} parent=0 // pred_check_branch
    %12 = sbr.rel (0) target = $region9
  $region8: #{ssim_pallas.1} parent=0 // pred_region
    _
  $region9: #{ssim_pallas.1} parent=0 // pred_fallthru
    _
  // Predicated region
  $region10: #{ssim_pallas.1} parent=0 // pred_check
    _
  $region11: #{ssim_pallas.1} parent=0 // pred_check_branch
    %14 = sbr.rel (0) target = $region13
  $region12: #{ssim_pallas.1} parent=0 // pred_region
    _
  $region13: #{ssim_pallas.1} parent=0 // pred_fallthru
    _
  // Predicated region
  $region14: #{ssim_pallas.1} parent=0 // pred_check
    _
  $region15: #{ssim_pallas.1} parent=0 // pred_check_branch
    %16 = sbr.rel (0) target = $region17
  $region16: #{ssim_pallas.1} parent=0 // pred_region
    _
  $region17: #{ssim_pallas.1} parent=0 // pred_fallthru
    _
  %v17 = vld [vmem:[%s0] sm:$0xff]
  %v18 = vld [vmem:[%s0 + $0x8] sm:$0xff]
  %v19 = vld [vmem:[%s1] sm:$0xff]
  %v20 = vld [vmem:[%s1 + $0x8] sm:$0xff]
  %v21 = vld [vmem:[%s2] sm:$0xff]
  %v22 = vld [vmem:[%s2 + $0x8] sm:$0xff]
  %v23 = vld [vmem:[%s3] sm:$0xff]
  %v24 = vld [vmem:[%s3 + $0x8] sm:$0xff]
  %v25 = vld [vmem:[%s3 + $0x10] sm:$0xff]
  %v26 = vld [vmem:[%s3 + $0x18] sm:$0xff]
  %v27 = vld [vmem:[%s3 + $0x20] sm:$0xff]
  %v28 = vld [vmem:[%s3 + $0x28] sm:$0xff]
  %v29 = vld [vmem:[%s3 + $0x30] sm:$0xff]
  %v30 = vld [vmem:[%s3 + $0x38] sm:$0xff]
  %v31 = vld [vmem:[%s3 + $0x40] sm:$0xff]
  %v32 = vld [vmem:[%s3 + $0x48] sm:$0xff]
  %v33 = vld [vmem:[%s3 + $0x50] sm:$0xff]
  %v34 = vld [vmem:[%s3 + $0x58] sm:$0xff]
  %v35 = vld [vmem:[%s3 + $0x60] sm:$0xff]
  %v36 = vld [vmem:[%s3 + $0x68] sm:$0xff]
  %v37 = vld [vmem:[%s3 + $0x70] sm:$0xff]
  %v38 = vld [vmem:[%s3 + $0x78] sm:$0xff]
  %39 = vmatprep.subr.mxu0 0.0
  %40 = vmatpush1.msra.mxu0 %v23
  %41 = vmatprep.subr.mxu0 0.0
  %42 = vmatpush1.msra.mxu0 %v24
  %43 = vmatprep.subr.mxu0 0.0
  %44 = vmatpush1.msra.mxu0 %v25
  %45 = vmatprep.subr.mxu0 0.0
  %46 = vmatpush1.msra.mxu0 %v26
  %47 = vmatprep.subr.mxu0 0.0
  %48 = vmatpush1.msra.mxu0 %v27
  %49 = vmatprep.subr.mxu0 0.0
  %50 = vmatpush1.msra.mxu0 %v28
  %51 = vmatprep.subr.mxu0 0.0
  %52 = vmatpush1.msra.mxu0 %v29
  %53 = vmatprep.subr.mxu0 0.0
  %54 = vmatpush1.msra.mxu0 %v30
  %55 = vmatprep.subr.mxu0 0.0
  %56 = vmatpush1.msra.mxu0 %v31
  %57 = vmatprep.subr.mxu0 0.0
  %58 = vmatpush1.msra.mxu0 %v32
  %59 = vmatprep.subr.mxu0 0.0
  %60 = vmatpush1.msra.mxu0 %v33
  %61 = vmatprep.subr.mxu0 0.0
  %62 = vmatpush1.msra.mxu0 %v34
  %63 = vmatprep.subr.mxu0 0.0
  %64 = vmatpush1.msra.mxu0 %v35
  %65 = vmatprep.subr.mxu0 0.0
  %66 = vmatpush1.msra.mxu0 %v36
  %67 = vmatprep.subr.mxu0 0.0
  %68 = vmatpush1.msra.mxu0 %v37
  %69 = vmatprep.subr.mxu0 0.0
  %70 = vmatpush1.msra.mxu0 %v38
  %71 = vmatprep.subr.mxu0 0.0
  %72 = vmatpush1.msra.mxu0 0.0
  %73 = vmatprep.subr.mxu0 0.0
  %74 = vmatpush1.msra.mxu0 0.0
  %75 = vmatprep.subr.mxu0 0.0
  %76 = vmatpush1.msra.mxu0 0.0
  %77 = vmatprep.subr.mxu0 0.0
  %78 = vmatpush1.msra.mxu0 0.0
  %79 = vmatprep.subr.mxu0 0.0
  %80 = vmatpush1.msra.mxu0 0.0
  %81 = vmatprep.subr.mxu0 0.0
  %82 = vmatpush1.msra.mxu0 0.0
  %83 = vmatprep.subr.mxu0 0.0
  %84 = vmatpush1.msra.mxu0 0.0
  %85 = vmatprep.subr.mxu0 0.0
  %86 = vmatpush1.msra.mxu0 0.0
  %87 = vmatprep.subr.mxu0 0.0
  %88 = vmatpush1.msra.mxu0 0.0
  %89 = vmatprep.subr.mxu0 0.0
  %90 = vmatpush1.msra.mxu0 0.0
  %91 = vmatprep.subr.mxu0 0.0
  %92 = vmatpush1.msra.mxu0 0.0
  %93 = vmatprep.subr.mxu0 0.0
  %94 = vmatpush1.msra.mxu0 0.0
  %95 = vmatprep.subr.mxu0 0.0
  %96 = vmatpush1.msra.mxu0 0.0
  %97 = vmatprep.subr.mxu0 0.0
  %98 = vmatpush1.msra.mxu0 0.0
  %99 = vmatprep.subr.mxu0 0.0
  %100 = vmatpush1.msra.mxu0 0.0
  %101 = vmatprep.subr.mxu0 0.0
  %102 = vmatpush1.msra.mxu0 0.0
  %103 = vmatprep.mubr.f32.mxu0 0.0
  %104 = vmatmul.mubr.f32.gmra.mrb[0].mxu0 %v17
  %v105 = vpop.f32.mrb[0].mxu0
  %v106 = vadd.f32 0.0, %v105
  %v107 = vpop.f32.mrb[0].mxu0
  %108 = vmatprep.mubr.f32.mxu0 0.0
  %109 = vmatmul.mubr.f32.gmra.mrb[0].mxu0 %v18
  %v110 = vpop.f32.mrb[0].mxu0
  %v111 = vadd.f32 0.0, %v110
  %v112 = vpop.f32.mrb[0].mxu0
  %113 = vdwg.mxu0
  %vm114 = vcmask 130048
  %v116 = vsel %vm114, %v21, 0
  %v119 = vsel %vm114, %v22, 0
  %121 = vmatprep.subr.mxu0 0.0
  %122 = vmatpush1.msra.mxu0 %v106
  %123 = vmatprep.subr.mxu0 0.0
  %124 = vmatpush1.msra.mxu0 %v111
  %125 = vmatprep.subr.mxu0 0.0
  %126 = vmatpush1.msra.mxu0 0.0
  %127 = vmatprep.subr.mxu0 0.0
  %128 = vmatpush1.msra.mxu0 0.0
  %129 = vmatprep.subr.mxu0 0.0
  %130 = vmatpush1.msra.mxu0 0.0
  %131 = vmatprep.subr.mxu0 0.0
  %132 = vmatpush1.msra.mxu0 0.0
  %133 = vmatprep.subr.mxu0 0.0
  %134 = vmatpush1.msra.mxu0 0.0
  %135 = vmatprep.subr.mxu0 0.0
  %136 = vmatpush1.msra.mxu0 0.0
  %137 = vmatprep.subr.mxu0 0.0
  %138 = vmatpush1.msra.mxu0 0.0
  %139 = vmatprep.subr.mxu0 0.0
  %140 = vmatpush1.msra.mxu0 0.0
  %141 = vmatprep.subr.mxu0 0.0
  %142 = vmatpush1.msra.mxu0 0.0
  %143 = vmatprep.subr.mxu0 0.0
  %144 = vmatpush1.msra.mxu0 0.0
  %145 = vmatprep.subr.mxu0 0.0
  %146 = vmatpush1.msra.mxu0 0.0
  %147 = vmatprep.subr.mxu0 0.0
  %148 = vmatpush1.msra.mxu0 0.0
  %149 = vmatprep.subr.mxu0 0.0
  %150 = vmatpush1.msra.mxu0 0.0
  %151 = vmatprep.subr.mxu0 0.0
  %152 = vmatpush1.msra.mxu0 0.0
  %153 = vmatprep.subr.mxu0 0.0
  %154 = vmatpush1.msra.mxu0 0.0
  %155 = vmatprep.subr.mxu0 0.0
  %156 = vmatpush1.msra.mxu0 0.0
  %157 = vmatprep.subr.mxu0 0.0
  %158 = vmatpush1.msra.mxu0 0.0
  %159 = vmatprep.subr.mxu0 0.0
  %160 = vmatpush1.msra.mxu0 0.0
  %161 = vmatprep.subr.mxu0 0.0
  %162 = vmatpush1.msra.mxu0 0.0
  %163 = vmatprep.subr.mxu0 0.0
  %164 = vmatpush1.msra.mxu0 0.0
  %165 = vmatprep.subr.mxu0 0.0
  %166 = vmatpush1.msra.mxu0 0.0
  %167 = vmatprep.subr.mxu0 0.0
  %168 = vmatpush1.msra.mxu0 0.0
  %169 = vmatprep.subr.mxu0 0.0
  %170 = vmatpush1.msra.mxu0 0.0
  %171 = vmatprep.subr.mxu0 0.0
  %172 = vmatpush1.msra.mxu0 0.0
  %173 = vmatprep.subr.mxu0 0.0
  %174 = vmatpush1.msra.mxu0 0.0
  %175 = vmatprep.subr.mxu0 0.0
  %176 = vmatpush1.msra.mxu0 0.0
  %177 = vmatprep.subr.mxu0 0.0
  %178 = vmatpush1.msra.mxu0 0.0
  %179 = vmatprep.subr.mxu0 0.0
  %180 = vmatpush1.msra.mxu0 0.0
  %181 = vmatprep.subr.mxu0 0.0
  %182 = vmatpush1.msra.mxu0 0.0
  %183 = vmatprep.subr.mxu0 0.0
  %184 = vmatpush1.msra.mxu0 0.0
  %185 = vmatprep.mubr.f32.mxu0 0.0
  %186 = vmatmul.mubr.f32.gmra.mrb[0].mxu0 %v116
  %v187 = vpop.f32.mrb[0].mxu0
  %v188 = vadd.f32 0.0, %v187
  %v189 = vpop.f32.mrb[0].mxu0
  %190 = vmatprep.mubr.f32.mxu0 0.0
  %191 = vmatmul.mubr.f32.gmra.mrb[0].mxu0 %v119
  %v192 = vpop.f32.mrb[0].mxu0
  %v193 = vadd.f32 0.0, %v192
  %v194 = vpop.f32.mrb[0].mxu0
  %195 = vdwg.mxu0
  %196 = vmatprep.subr.mxu0 0.0
  %197 = vmatpush1.msra.mxu0 %v23
  %198 = vmatprep.subr.mxu0 0.0
  %199 = vmatpush1.msra.mxu0 %v24
  %200 = vmatprep.subr.mxu0 0.0
  %201 = vmatpush1.msra.mxu0 %v25
  %202 = vmatprep.subr.mxu0 0.0
  %203 = vmatpush1.msra.mxu0 %v26
  %204 = vmatprep.subr.mxu0 0.0
  %205 = vmatpush1.msra.mxu0 %v27
  %206 = vmatprep.subr.mxu0 0.0
  %207 = vmatpush1.msra.mxu0 %v28
  %208 = vmatprep.subr.mxu0 0.0
  %209 = vmatpush1.msra.mxu0 %v29
  %210 = vmatprep.subr.mxu0 0.0
  %211 = vmatpush1.msra.mxu0 %v30
  %212 = vmatprep.subr.mxu0 0.0
  %213 = vmatpush1.msra.mxu0 %v31
  %214 = vmatprep.subr.mxu0 0.0
  %215 = vmatpush1.msra.mxu0 %v32
  %216 = vmatprep.subr.mxu0 0.0
  %217 = vmatpush1.msra.mxu0 %v33
  %218 = vmatprep.subr.mxu0 0.0
  %219 = vmatpush1.msra.mxu0 %v34
  %220 = vmatprep.subr.mxu0 0.0
  %221 = vmatpush1.msra.mxu0 %v35
  %222 = vmatprep.subr.mxu0 0.0
  %223 = vmatpush1.msra.mxu0 %v36
  %224 = vmatprep.subr.mxu0 0.0
  %225 = vmatpush1.msra.mxu0 %v37
  %226 = vmatprep.subr.mxu0 0.0
  %227 = vmatpush1.msra.mxu0 %v38
  %228 = vmatprep.subr.mxu0 0.0
  %229 = vmatpush1.msra.mxu0 0.0
  %230 = vmatprep.subr.mxu0 0.0
  %231 = vmatpush1.msra.mxu0 0.0
  %232 = vmatprep.subr.mxu0 0.0
  %233 = vmatpush1.msra.mxu0 0.0
  %234 = vmatprep.subr.mxu0 0.0
  %235 = vmatpush1.msra.mxu0 0.0
  %236 = vmatprep.subr.mxu0 0.0
  %237 = vmatpush1.msra.mxu0 0.0
  %238 = vmatprep.subr.mxu0 0.0
  %239 = vmatpush1.msra.mxu0 0.0
  %240 = vmatprep.subr.mxu0 0.0
  %241 = vmatpush1.msra.mxu0 0.0
  %242 = vmatprep.subr.mxu0 0.0
  %243 = vmatpush1.msra.mxu0 0.0
  %244 = vmatprep.subr.mxu0 0.0
  %245 = vmatpush1.msra.mxu0 0.0
  %246 = vmatprep.subr.mxu0 0.0
  %247 = vmatpush1.msra.mxu0 0.0
  %248 = vmatprep.subr.mxu0 0.0
  %249 = vmatpush1.msra.mxu0 0.0
  %250 = vmatprep.subr.mxu0 0.0
  %251 = vmatpush1.msra.mxu0 0.0
  %252 = vmatprep.subr.mxu0 0.0
  %253 = vmatpush1.msra.mxu0 0.0
  %254 = vmatprep.subr.mxu0 0.0
  %255 = vmatpush1.msra.mxu0 0.0
  %256 = vmatprep.subr.mxu0 0.0
  %257 = vmatpush1.msra.mxu0 0.0
  %258 = vmatprep.subr.mxu0 0.0
  %259 = vmatpush1.msra.mxu0 0.0
  %260 = vmatprep.mubr.f32.mxu0 0.0
  %261 = vmatmul.mubr.f32.gmra.mrb[0].mxu0 %v19
  %v262 = vpop.f32.mrb[0].mxu0
  %v263 = vadd.f32 0.0, %v262
  %v264 = vpop.f32.mrb[0].mxu0
  %265 = vmatprep.mubr.f32.mxu0 0.0
  %266 = vmatmul.mubr.f32.gmra.mrb[0].mxu0 %v20
  %v267 = vpop.f32.mrb[0].mxu0
  %v268 = vadd.f32 0.0, %v267
  %v269 = vpop.f32.mrb[0].mxu0
  %270 = vdwg.mxu0
  %271 = vmatprep.subr.mxu0 0.0
  %272 = vmatpush1.msra.mxu0 %v263
  %273 = vmatprep.subr.mxu0 0.0
  %274 = vmatpush1.msra.mxu0 %v268
  %275 = vmatprep.subr.mxu0 0.0
  %276 = vmatpush1.msra.mxu0 0.0
  %277 = vmatprep.subr.mxu0 0.0
  %278 = vmatpush1.msra.mxu0 0.0
  %279 = vmatprep.subr.mxu0 0.0
  %280 = vmatpush1.msra.mxu0 0.0
  %281 = vmatprep.subr.mxu0 0.0
  %282 = vmatpush1.msra.mxu0 0.0
  %283 = vmatprep.subr.mxu0 0.0
  %284 = vmatpush1.msra.mxu0 0.0
  %285 = vmatprep.subr.mxu0 0.0
  %286 = vmatpush1.msra.mxu0 0.0
  %287 = vmatprep.subr.mxu0 0.0
  %288 = vmatpush1.msra.mxu0 0.0
  %289 = vmatprep.subr.mxu0 0.0
  %290 = vmatpush1.msra.mxu0 0.0
  %291 = vmatprep.subr.mxu0 0.0
  %292 = vmatpush1.msra.mxu0 0.0
  %293 = vmatprep.subr.mxu0 0.0
  %294 = vmatpush1.msra.mxu0 0.0
  %295 = vmatprep.subr.mxu0 0.0
  %296 = vmatpush1.msra.mxu0 0.0
  %297 = vmatprep.subr.mxu0 0.0
  %298 = vmatpush1.msra.mxu0 0.0
  %299 = vmatprep.subr.mxu0 0.0
  %300 = vmatpush1.msra.mxu0 0.0
  %301 = vmatprep.subr.mxu0 0.0
  %302 = vmatpush1.msra.mxu0 0.0
  %303 = vmatprep.subr.mxu0 0.0
  %304 = vmatpush1.msra.mxu0 0.0
  %305 = vmatprep.subr.mxu0 0.0
  %306 = vmatpush1.msra.mxu0 0.0
  %307 = vmatprep.subr.mxu0 0.0
  %308 = vmatpush1.msra.mxu0 0.0
  %309 = vmatprep.subr.mxu0 0.0
  %310 = vmatpush1.msra.mxu0 0.0
  %311 = vmatprep.subr.mxu0 0.0
  %312 = vmatpush1.msra.mxu0 0.0
  %313 = vmatprep.subr.mxu0 0.0
  %314 = vmatpush1.msra.mxu0 0.0
  %315 = vmatprep.subr.mxu0 0.0
  %316 = vmatpush1.msra.mxu0 0.0
  %317 = vmatprep.subr.mxu0 0.0
  %318 = vmatpush1.msra.mxu0 0.0
  %319 = vmatprep.subr.mxu0 0.0
  %320 = vmatpush1.msra.mxu0 0.0
  %321 = vmatprep.subr.mxu0 0.0
  %322 = vmatpush1.msra.mxu0 0.0
  %323 = vmatprep.subr.mxu0 0.0
  %324 = vmatpush1.msra.mxu0 0.0
  %325 = vmatprep.subr.mxu0 0.0
  %326 = vmatpush1.msra.mxu0 0.0
  %327 = vmatprep.subr.mxu0 0.0
  %328 = vmatpush1.msra.mxu0 0.0
  %329 = vmatprep.subr.mxu0 0.0
  %330 = vmatpush1.msra.mxu0 0.0
  %331 = vmatprep.subr.mxu0 0.0
  %332 = vmatpush1.msra.mxu0 0.0
  %333 = vmatprep.subr.mxu0 0.0
  %334 = vmatpush1.msra.mxu0 0.0
  %335 = vmatprep.mubr.f32.mxu0 0.0
  %336 = vmatmul.mubr.f32.gmra.mrb[0].mxu0 %v116
  %v337 = vpop.f32.mrb[0].mxu0
  %v338 = vadd.f32 0.0, %v337
  %v339 = vpop.f32.mrb[0].mxu0
  %340 = vmatprep.mubr.f32.mxu0 0.0
  %341 = vmatmul.mubr.f32.gmra.mrb[0].mxu0 %v119
  %v342 = vpop.f32.mrb[0].mxu0
  %v343 = vadd.f32 0.0, %v342
  %v344 = vpop.f32.mrb[0].mxu0
  %345 = vdwg.mxu0
  %v346 = vmul.f32 %v17, %v17
  %v347 = vmul.f32 %v18, %v18
  %348 = vmatprep.subr.mxu0 0.0
  %349 = vmatpush1.msra.mxu0 %v23
  %350 = vmatprep.subr.mxu0 0.0
  %351 = vmatpush1.msra.mxu0 %v24
  %352 = vmatprep.subr.mxu0 0.0
  %353 = vmatpush1.msra.mxu0 %v25
  %354 = vmatprep.subr.mxu0 0.0
  %355 = vmatpush1.msra.mxu0 %v26
  %356 = vmatprep.subr.mxu0 0.0
  %357 = vmatpush1.msra.mxu0 %v27
  %358 = vmatprep.subr.mxu0 0.0
  %359 = vmatpush1.msra.mxu0 %v28
  %360 = vmatprep.subr.mxu0 0.0
  %361 = vmatpush1.msra.mxu0 %v29
  %362 = vmatprep.subr.mxu0 0.0
  %363 = vmatpush1.msra.mxu0 %v30
  %364 = vmatprep.subr.mxu0 0.0
  %365 = vmatpush1.msra.mxu0 %v31
  %366 = vmatprep.subr.mxu0 0.0
  %367 = vmatpush1.msra.mxu0 %v32
  %368 = vmatprep.subr.mxu0 0.0
  %369 = vmatpush1.msra.mxu0 %v33
  %370 = vmatprep.subr.mxu0 0.0
  %371 = vmatpush1.msra.mxu0 %v34
  %372 = vmatprep.subr.mxu0 0.0
  %373 = vmatpush1.msra.mxu0 %v35
  %374 = vmatprep.subr.mxu0 0.0
  %375 = vmatpush1.msra.mxu0 %v36
  %376 = vmatprep.subr.mxu0 0.0
  %377 = vmatpush1.msra.mxu0 %v37
  %378 = vmatprep.subr.mxu0 0.0
  %379 = vmatpush1.msra.mxu0 %v38
  %380 = vmatprep.subr.mxu0 0.0
  %381 = vmatpush1.msra.mxu0 0.0
  %382 = vmatprep.subr.mxu0 0.0
  %383 = vmatpush1.msra.mxu0 0.0
  %384 = vmatprep.subr.mxu0 0.0
  %385 = vmatpush1.msra.mxu0 0.0
  %386 = vmatprep.subr.mxu0 0.0
  %387 = vmatpush1.msra.mxu0 0.0
  %388 = vmatprep.subr.mxu0 0.0
  %389 = vmatpush1.msra.mxu0 0.0
  %390 = vmatprep.subr.mxu0 0.0
  %391 = vmatpush1.msra.mxu0 0.0
  %392 = vmatprep.subr.mxu0 0.0
  %393 = vmatpush1.msra.mxu0 0.0
  %394 = vmatprep.subr.mxu0 0.0
  %395 = vmatpush1.msra.mxu0 0.0
  %396 = vmatprep.subr.mxu0 0.0
  %397 = vmatpush1.msra.mxu0 0.0
  %398 = vmatprep.subr.mxu0 0.0
  %399 = vmatpush1.msra.mxu0 0.0
  %400 = vmatprep.subr.mxu0 0.0
  %401 = vmatpush1.msra.mxu0 0.0
  %402 = vmatprep.subr.mxu0 0.0
  %403 = vmatpush1.msra.mxu0 0.0
  %404 = vmatprep.subr.mxu0 0.0
  %405 = vmatpush1.msra.mxu0 0.0
  %406 = vmatprep.subr.mxu0 0.0
  %407 = vmatpush1.msra.mxu0 0.0
  %408 = vmatprep.subr.mxu0 0.0
  %409 = vmatpush1.msra.mxu0 0.0
  %410 = vmatprep.subr.mxu0 0.0
  %411 = vmatpush1.msra.mxu0 0.0
  %412 = vmatprep.mubr.f32.mxu0 0.0
  %413 = vmatmul.mubr.f32.gmra.mrb[0].mxu0 %v346
  %v414 = vpop.f32.mrb[0].mxu0
  %v415 = vadd.f32 0.0, %v414
  %v416 = vpop.f32.mrb[0].mxu0
  %417 = vmatprep.mubr.f32.mxu0 0.0
  %418 = vmatmul.mubr.f32.gmra.mrb[0].mxu0 %v347
  %v419 = vpop.f32.mrb[0].mxu0
  %v420 = vadd.f32 0.0, %v419
  %v421 = vpop.f32.mrb[0].mxu0
  %422 = vdwg.mxu0
  %423 = vmatprep.subr.mxu0 0.0
  %424 = vmatpush1.msra.mxu0 %v415
  %425 = vmatprep.subr.mxu0 0.0
  %426 = vmatpush1.msra.mxu0 %v420
  %427 = vmatprep.subr.mxu0 0.0
  %428 = vmatpush1.msra.mxu0 0.0
  %429 = vmatprep.subr.mxu0 0.0
  %430 = vmatpush1.msra.mxu0 0.0
  %431 = vmatprep.subr.mxu0 0.0
  %432 = vmatpush1.msra.mxu0 0.0
  %433 = vmatprep.subr.mxu0 0.0
  %434 = vmatpush1.msra.mxu0 0.0
  %435 = vmatprep.subr.mxu0 0.0
  %436 = vmatpush1.msra.mxu0 0.0
  %437 = vmatprep.subr.mxu0 0.0
  %438 = vmatpush1.msra.mxu0 0.0
  %439 = vmatprep.subr.mxu0 0.0
  %440 = vmatpush1.msra.mxu0 0.0
  %441 = vmatprep.subr.mxu0 0.0
  %442 = vmatpush1.msra.mxu0 0.0
  %443 = vmatprep.subr.mxu0 0.0
  %444 = vmatpush1.msra.mxu0 0.0
  %445 = vmatprep.subr.mxu0 0.0
  %446 = vmatpush1.msra.mxu0 0.0
  %447 = vmatprep.subr.mxu0 0.0
  %448 = vmatpush1.msra.mxu0 0.0
  %449 = vmatprep.subr.mxu0 0.0
  %450 = vmatpush1.msra.mxu0 0.0
  %451 = vmatprep.subr.mxu0 0.0
  %452 = vmatpush1.msra.mxu0 0.0
  %453 = vmatprep.subr.mxu0 0.0
  %454 = vmatpush1.msra.mxu0 0.0
  %455 = vmatprep.subr.mxu0 0.0
  %456 = vmatpush1.msra.mxu0 0.0
  %457 = vmatprep.subr.mxu0 0.0
  %458 = vmatpush1.msra.mxu0 0.0
  %459 = vmatprep.subr.mxu0 0.0
  %460 = vmatpush1.msra.mxu0 0.0
  %461 = vmatprep.subr.mxu0 0.0
  %462 = vmatpush1.msra.mxu0 0.0
  %463 = vmatprep.subr.mxu0 0.0
  %464 = vmatpush1.msra.mxu0 0.0
  %465 = vmatprep.subr.mxu0 0.0
  %466 = vmatpush1.msra.mxu0 0.0
  %467 = vmatprep.subr.mxu0 0.0
  %468 = vmatpush1.msra.mxu0 0.0
  %469 = vmatprep.subr.mxu0 0.0
  %470 = vmatpush1.msra.mxu0 0.0
  %471 = vmatprep.subr.mxu0 0.0
  %472 = vmatpush1.msra.mxu0 0.0
  %473 = vmatprep.subr.mxu0 0.0
  %474 = vmatpush1.msra.mxu0 0.0
  %475 = vmatprep.subr.mxu0 0.0
  %476 = vmatpush1.msra.mxu0 0.0
  %477 = vmatprep.subr.mxu0 0.0
  %478 = vmatpush1.msra.mxu0 0.0
  %479 = vmatprep.subr.mxu0 0.0
  %480 = vmatpush1.msra.mxu0 0.0
  %481 = vmatprep.subr.mxu0 0.0
  %482 = vmatpush1.msra.mxu0 0.0
  %483 = vmatprep.subr.mxu0 0.0
  %484 = vmatpush1.msra.mxu0 0.0
  %485 = vmatprep.subr.mxu0 0.0
  %486 = vmatpush1.msra.mxu0 0.0
  %487 = vmatprep.mubr.f32.mxu0 0.0
  %488 = vmatmul.mubr.f32.gmra.mrb[0].mxu0 %v116
  %v489 = vpop.f32.mrb[0].mxu0
  %v490 = vadd.f32 0.0, %v489
  %v491 = vpop.f32.mrb[0].mxu0
  %492 = vmatprep.mubr.f32.mxu0 0.0
  %493 = vmatmul.mubr.f32.gmra.mrb[0].mxu0 %v119
  %v494 = vpop.f32.mrb[0].mxu0
  %v495 = vadd.f32 0.0, %v494
  %v496 = vpop.f32.mrb[0].mxu0
  %497 = vdwg.mxu0
  %v498 = vmul.f32 %v19, %v19
  %v499 = vmul.f32 %v20, %v20
  %500 = vmatprep.subr.mxu0 0.0
  %501 = vmatpush1.msra.mxu0 %v23
  %502 = vmatprep.subr.mxu0 0.0
  %503 = vmatpush1.msra.mxu0 %v24
  %504 = vmatprep.subr.mxu0 0.0
  %505 = vmatpush1.msra.mxu0 %v25
  %506 = vmatprep.subr.mxu0 0.0
  %507 = vmatpush1.msra.mxu0 %v26
  %508 = vmatprep.subr.mxu0 0.0
  %509 = vmatpush1.msra.mxu0 %v27
  %510 = vmatprep.subr.mxu0 0.0
  %511 = vmatpush1.msra.mxu0 %v28
  %512 = vmatprep.subr.mxu0 0.0
  %513 = vmatpush1.msra.mxu0 %v29
  %514 = vmatprep.subr.mxu0 0.0
  %515 = vmatpush1.msra.mxu0 %v30
  %516 = vmatprep.subr.mxu0 0.0
  %517 = vmatpush1.msra.mxu0 %v31
  %518 = vmatprep.subr.mxu0 0.0
  %519 = vmatpush1.msra.mxu0 %v32
  %520 = vmatprep.subr.mxu0 0.0
  %521 = vmatpush1.msra.mxu0 %v33
  %522 = vmatprep.subr.mxu0 0.0
  %523 = vmatpush1.msra.mxu0 %v34
  %524 = vmatprep.subr.mxu0 0.0
  %525 = vmatpush1.msra.mxu0 %v35
  %526 = vmatprep.subr.mxu0 0.0
  %527 = vmatpush1.msra.mxu0 %v36
  %528 = vmatprep.subr.mxu0 0.0
  %529 = vmatpush1.msra.mxu0 %v37
  %530 = vmatprep.subr.mxu0 0.0
  %531 = vmatpush1.msra.mxu0 %v38
  %532 = vmatprep.subr.mxu0 0.0
  %533 = vmatpush1.msra.mxu0 0.0
  %534 = vmatprep.subr.mxu0 0.0
  %535 = vmatpush1.msra.mxu0 0.0
  %536 = vmatprep.subr.mxu0 0.0
  %537 = vmatpush1.msra.mxu0 0.0
  %538 = vmatprep.subr.mxu0 0.0
  %539 = vmatpush1.msra.mxu0 0.0
  %540 = vmatprep.subr.mxu0 0.0
  %541 = vmatpush1.msra.mxu0 0.0
  %542 = vmatprep.subr.mxu0 0.0
  %543 = vmatpush1.msra.mxu0 0.0
  %544 = vmatprep.subr.mxu0 0.0
  %545 = vmatpush1.msra.mxu0 0.0
  %546 = vmatprep.subr.mxu0 0.0
  %547 = vmatpush1.msra.mxu0 0.0
  %548 = vmatprep.subr.mxu0 0.0
  %549 = vmatpush1.msra.mxu0 0.0
  %550 = vmatprep.subr.mxu0 0.0
  %551 = vmatpush1.msra.mxu0 0.0
  %552 = vmatprep.subr.mxu0 0.0
  %553 = vmatpush1.msra.mxu0 0.0
  %554 = vmatprep.subr.mxu0 0.0
  %555 = vmatpush1.msra.mxu0 0.0
  %556 = vmatprep.subr.mxu0 0.0
  %557 = vmatpush1.msra.mxu0 0.0
  %558 = vmatprep.subr.mxu0 0.0
  %559 = vmatpush1.msra.mxu0 0.0
  %560 = vmatprep.subr.mxu0 0.0
  %561 = vmatpush1.msra.mxu0 0.0
  %562 = vmatprep.subr.mxu0 0.0
  %563 = vmatpush1.msra.mxu0 0.0
  %564 = vmatprep.mubr.f32.mxu0 0.0
  %565 = vmatmul.mubr.f32.gmra.mrb[0].mxu0 %v498
  %v566 = vpop.f32.mrb[0].mxu0
  %v567 = vadd.f32 0.0, %v566
  %v568 = vpop.f32.mrb[0].mxu0
  %569 = vmatprep.mubr.f32.mxu0 0.0
  %570 = vmatmul.mubr.f32.gmra.mrb[0].mxu0 %v499
  %v571 = vpop.f32.mrb[0].mxu0
  %v572 = vadd.f32 0.0, %v571
  %v573 = vpop.f32.mrb[0].mxu0
  %574 = vdwg.mxu0
  %575 = vmatprep.subr.mxu0 0.0
  %576 = vmatpush1.msra.mxu0 %v567
  %577 = vmatprep.subr.mxu0 0.0
  %578 = vmatpush1.msra.mxu0 %v572
  %579 = vmatprep.subr.mxu0 0.0
  %580 = vmatpush1.msra.mxu0 0.0
  %581 = vmatprep.subr.mxu0 0.0
  %582 = vmatpush1.msra.mxu0 0.0
  %583 = vmatprep.subr.mxu0 0.0
  %584 = vmatpush1.msra.mxu0 0.0
  %585 = vmatprep.subr.mxu0 0.0
  %586 = vmatpush1.msra.mxu0 0.0
  %587 = vmatprep.subr.mxu0 0.0
  %588 = vmatpush1.msra.mxu0 0.0
  %589 = vmatprep.subr.mxu0 0.0
  %590 = vmatpush1.msra.mxu0 0.0
  %591 = vmatprep.subr.mxu0 0.0
  %592 = vmatpush1.msra.mxu0 0.0
  %593 = vmatprep.subr.mxu0 0.0
  %594 = vmatpush1.msra.mxu0 0.0
  %595 = vmatprep.subr.mxu0 0.0
  %596 = vmatpush1.msra.mxu0 0.0
  %597 = vmatprep.subr.mxu0 0.0
  %598 = vmatpush1.msra.mxu0 0.0
  %599 = vmatprep.subr.mxu0 0.0
  %600 = vmatpush1.msra.mxu0 0.0
  %601 = vmatprep.subr.mxu0 0.0
  %602 = vmatpush1.msra.mxu0 0.0
  %603 = vmatprep.subr.mxu0 0.0
  %604 = vmatpush1.msra.mxu0 0.0
  %605 = vmatprep.subr.mxu0 0.0
  %606 = vmatpush1.msra.mxu0 0.0
  %607 = vmatprep.subr.mxu0 0.0
  %608 = vmatpush1.msra.mxu0 0.0
  %609 = vmatprep.subr.mxu0 0.0
  %610 = vmatpush1.msra.mxu0 0.0
  %611 = vmatprep.subr.mxu0 0.0
  %612 = vmatpush1.msra.mxu0 0.0
  %613 = vmatprep.subr.mxu0 0.0
  %614 = vmatpush1.msra.mxu0 0.0
  %615 = vmatprep.subr.mxu0 0.0
  %616 = vmatpush1.msra.mxu0 0.0
  %617 = vmatprep.subr.mxu0 0.0
  %618 = vmatpush1.msra.mxu0 0.0
  %619 = vmatprep.subr.mxu0 0.0
  %620 = vmatpush1.msra.mxu0 0.0
  %621 = vmatprep.subr.mxu0 0.0
  %622 = vmatpush1.msra.mxu0 0.0
  %623 = vmatprep.subr.mxu0 0.0
  %624 = vmatpush1.msra.mxu0 0.0
  %625 = vmatprep.subr.mxu0 0.0
  %626 = vmatpush1.msra.mxu0 0.0
  %627 = vmatprep.subr.mxu0 0.0
  %628 = vmatpush1.msra.mxu0 0.0
  %629 = vmatprep.subr.mxu0 0.0
  %630 = vmatpush1.msra.mxu0 0.0
  %631 = vmatprep.subr.mxu0 0.0
  %632 = vmatpush1.msra.mxu0 0.0
  %633 = vmatprep.subr.mxu0 0.0
  %634 = vmatpush1.msra.mxu0 0.0
  %635 = vmatprep.subr.mxu0 0.0
  %636 = vmatpush1.msra.mxu0 0.0
  %637 = vmatprep.subr.mxu0 0.0
  %638 = vmatpush1.msra.mxu0 0.0
  %639 = vmatprep.mubr.f32.mxu0 0.0
  %640 = vmatmul.mubr.f32.gmra.mrb[0].mxu0 %v116
  %v641 = vpop.f32.mrb[0].mxu0
  %v642 = vadd.f32 0.0, %v641
  %v643 = vpop.f32.mrb[0].mxu0
  %644 = vmatprep.mubr.f32.mxu0 0.0
  %645 = vmatmul.mubr.f32.gmra.mrb[0].mxu0 %v119
  %v646 = vpop.f32.mrb[0].mxu0
  %v647 = vadd.f32 0.0, %v646
  %v648 = vpop.f32.mrb[0].mxu0
  %649 = vdwg.mxu0
  %v650 = vmul.f32 %v17, %v19
  %v651 = vmul.f32 %v18, %v20
  %652 = vmatprep.subr.mxu0 0.0
  %653 = vmatpush1.msra.mxu0 %v23
  %654 = vmatprep.subr.mxu0 0.0
  %655 = vmatpush1.msra.mxu0 %v24
  %656 = vmatprep.subr.mxu0 0.0
  %657 = vmatpush1.msra.mxu0 %v25
  %658 = vmatprep.subr.mxu0 0.0
  %659 = vmatpush1.msra.mxu0 %v26
  %660 = vmatprep.subr.mxu0 0.0
  %661 = vmatpush1.msra.mxu0 %v27
  %662 = vmatprep.subr.mxu0 0.0
  %663 = vmatpush1.msra.mxu0 %v28
  %664 = vmatprep.subr.mxu0 0.0
  %665 = vmatpush1.msra.mxu0 %v29
  %666 = vmatprep.subr.mxu0 0.0
  %667 = vmatpush1.msra.mxu0 %v30
  %668 = vmatprep.subr.mxu0 0.0
  %669 = vmatpush1.msra.mxu0 %v31
  %670 = vmatprep.subr.mxu0 0.0
  %671 = vmatpush1.msra.mxu0 %v32
  %672 = vmatprep.subr.mxu0 0.0
  %673 = vmatpush1.msra.mxu0 %v33
  %674 = vmatprep.subr.mxu0 0.0
  %675 = vmatpush1.msra.mxu0 %v34
  %676 = vmatprep.subr.mxu0 0.0
  %677 = vmatpush1.msra.mxu0 %v35
  %678 = vmatprep.subr.mxu0 0.0
  %679 = vmatpush1.msra.mxu0 %v36
  %680 = vmatprep.subr.mxu0 0.0
  %681 = vmatpush1.msra.mxu0 %v37
  %682 = vmatprep.subr.mxu0 0.0
  %683 = vmatpush1.msra.mxu0 %v38
  %684 = vmatprep.subr.mxu0 0.0
  %685 = vmatpush1.msra.mxu0 0.0
  %686 = vmatprep.subr.mxu0 0.0
  %687 = vmatpush1.msra.mxu0 0.0
  %688 = vmatprep.subr.mxu0 0.0
  %689 = vmatpush1.msra.mxu0 0.0
  %690 = vmatprep.subr.mxu0 0.0
  %691 = vmatpush1.msra.mxu0 0.0
  %692 = vmatprep.subr.mxu0 0.0
  %693 = vmatpush1.msra.mxu0 0.0
  %694 = vmatprep.subr.mxu0 0.0
  %695 = vmatpush1.msra.mxu0 0.0
  %696 = vmatprep.subr.mxu0 0.0
  %697 = vmatpush1.msra.mxu0 0.0
  %698 = vmatprep.subr.mxu0 0.0
  %699 = vmatpush1.msra.mxu0 0.0
  %700 = vmatprep.subr.mxu0 0.0
  %701 = vmatpush1.msra.mxu0 0.0
  %702 = vmatprep.subr.mxu0 0.0
  %703 = vmatpush1.msra.mxu0 0.0
  %704 = vmatprep.subr.mxu0 0.0
  %705 = vmatpush1.msra.mxu0 0.0
  %706 = vmatprep.subr.mxu0 0.0
  %707 = vmatpush1.msra.mxu0 0.0
  %708 = vmatprep.subr.mxu0 0.0
  %709 = vmatpush1.msra.mxu0 0.0
  %710 = vmatprep.subr.mxu0 0.0
  %711 = vmatpush1.msra.mxu0 0.0
  %712 = vmatprep.subr.mxu0 0.0
  %713 = vmatpush1.msra.mxu0 0.0
  %714 = vmatprep.subr.mxu0 0.0
  %715 = vmatpush1.msra.mxu0 0.0
  %716 = vmatprep.mubr.f32.mxu0 0.0
  %717 = vmatmul.mubr.f32.gmra.mrb[0].mxu0 %v650
  %v718 = vpop.f32.mrb[0].mxu0
  %v719 = vadd.f32 0.0, %v718
  %v720 = vpop.f32.mrb[0].mxu0
  %721 = vmatprep.mubr.f32.mxu0 0.0
  %722 = vmatmul.mubr.f32.gmra.mrb[0].mxu0 %v651
  %v723 = vpop.f32.mrb[0].mxu0
  %v724 = vadd.f32 0.0, %v723
  %v725 = vpop.f32.mrb[0].mxu0
  %726 = vdwg.mxu0
  %727 = vmatprep.subr.mxu0 0.0
  %728 = vmatpush1.msra.mxu0 %v719
  %729 = vmatprep.subr.mxu0 0.0
  %730 = vmatpush1.msra.mxu0 %v724
  %731 = vmatprep.subr.mxu0 0.0
  %732 = vmatpush1.msra.mxu0 0.0
  %733 = vmatprep.subr.mxu0 0.0
  %734 = vmatpush1.msra.mxu0 0.0
  %735 = vmatprep.subr.mxu0 0.0
  %736 = vmatpush1.msra.mxu0 0.0
  %737 = vmatprep.subr.mxu0 0.0
  %738 = vmatpush1.msra.mxu0 0.0
  %739 = vmatprep.subr.mxu0 0.0
  %740 = vmatpush1.msra.mxu0 0.0
  %741 = vmatprep.subr.mxu0 0.0
  %742 = vmatpush1.msra.mxu0 0.0
  %743 = vmatprep.subr.mxu0 0.0
  %744 = vmatpush1.msra.mxu0 0.0
  %745 = vmatprep.subr.mxu0 0.0
  %746 = vmatpush1.msra.mxu0 0.0
  %747 = vmatprep.subr.mxu0 0.0
  %748 = vmatpush1.msra.mxu0 0.0
  %749 = vmatprep.subr.mxu0 0.0
  %750 = vmatpush1.msra.mxu0 0.0
  %751 = vmatprep.subr.mxu0 0.0
  %752 = vmatpush1.msra.mxu0 0.0
  %753 = vmatprep.subr.mxu0 0.0
  %754 = vmatpush1.msra.mxu0 0.0
  %755 = vmatprep.subr.mxu0 0.0
  %756 = vmatpush1.msra.mxu0 0.0
  %757 = vmatprep.subr.mxu0 0.0
  %758 = vmatpush1.msra.mxu0 0.0
  %759 = vmatprep.subr.mxu0 0.0
  %760 = vmatpush1.msra.mxu0 0.0
  %761 = vmatprep.subr.mxu0 0.0
  %762 = vmatpush1.msra.mxu0 0.0
  %763 = vmatprep.subr.mxu0 0.0
  %764 = vmatpush1.msra.mxu0 0.0
  %765 = vmatprep.subr.mxu0 0.0
  %766 = vmatpush1.msra.mxu0 0.0
  %767 = vmatprep.subr.mxu0 0.0
  %768 = vmatpush1.msra.mxu0 0.0
  %769 = vmatprep.subr.mxu0 0.0
  %770 = vmatpush1.msra.mxu0 0.0
  %771 = vmatprep.subr.mxu0 0.0
  %772 = vmatpush1.msra.mxu0 0.0
  %773 = vmatprep.subr.mxu0 0.0
  %774 = vmatpush1.msra.mxu0 0.0
  %775 = vmatprep.subr.mxu0 0.0
  %776 = vmatpush1.msra.mxu0 0.0
  %777 = vmatprep.subr.mxu0 0.0
  %778 = vmatpush1.msra.mxu0 0.0
  %779 = vmatprep.subr.mxu0 0.0
  %780 = vmatpush1.msra.mxu0 0.0
  %781 = vmatprep.subr.mxu0 0.0
  %782 = vmatpush1.msra.mxu0 0.0
  %783 = vmatprep.subr.mxu0 0.0
  %784 = vmatpush1.msra.mxu0 0.0
  %785 = vmatprep.subr.mxu0 0.0
  %786 = vmatpush1.msra.mxu0 0.0
  %787 = vmatprep.subr.mxu0 0.0
  %788 = vmatpush1.msra.mxu0 0.0
  %789 = vmatprep.subr.mxu0 0.0
  %790 = vmatpush1.msra.mxu0 0.0
  %791 = vmatprep.mubr.f32.mxu0 0.0
  %792 = vmatmul.mubr.f32.gmra.mrb[0].mxu0 %v116
  %v793 = vpop.f32.mrb[0].mxu0
  %v794 = vadd.f32 0.0, %v793
  %v795 = vpop.f32.mrb[0].mxu0
  %796 = vmatprep.mubr.f32.mxu0 0.0
  %797 = vmatmul.mubr.f32.gmra.mrb[0].mxu0 %v119
  %v798 = vpop.f32.mrb[0].mxu0
  %v799 = vadd.f32 0.0, %v798
  %v800 = vpop.f32.mrb[0].mxu0
  %801 = vdwg.mxu0
  %v802 = vmul.f32 %v188, %v188
  %v803 = vmul.f32 %v193, %v193
  %v804 = vmul.f32 %v338, %v338
  %v805 = vmul.f32 %v343, %v343
  %v806 = vmul.f32 %v188, %v338
  %v807 = vmul.f32 %v193, %v343
  %v808 = vsub.f32 %v490, %v802
  %v809 = vsub.f32 %v495, %v803
  %v810 = vsub.f32 %v642, %v804
  %v811 = vsub.f32 %v647, %v805
  %v812 = vsub.f32 %v794, %v806
  %v813 = vsub.f32 %v799, %v807
  %v814 = vmul.f32 %v806, 2.0
  %v815 = vmul.f32 %v807, 2.0
  %v816 = vadd.f32 %v814, 0.0001
  %v817 = vadd.f32 %v815, 0.0001
  %v818 = vmul.f32 %v812, 2.0
  %v819 = vmul.f32 %v813, 2.0
  %v820 = vadd.f32 %v818, 0.0009
  %v821 = vadd.f32 %v819, 0.0009
  %v822 = vmul.f32 %v816, %v820
  %v823 = vmul.f32 %v817, %v821
  %v824 = vadd.f32 %v802, %v804
  %v825 = vadd.f32 %v803, %v805
  %v826 = vadd.f32 %v824, 0.0001
  %v827 = vadd.f32 %v825, 0.0001
  %v828 = vadd.f32 %v808, %v810
  %v829 = vadd.f32 %v809, %v811
  %v830 = vadd.f32 %v828, 0.0009
  %v831 = vadd.f32 %v829, 0.0009
  %v832 = vmul.f32 %v826, %v830
  %v833 = vmul.f32 %v827, %v831
  %v834 = vrcp.pop %v832
  %v835 = vmul.f32 %v822, %v834
  %v836 = vrcp.pop %v833
  %v837 = vmul.f32 %v823, %v836
  %v838 = vadd.f32 %v835, %v837
  %839 = vadd.xlane.f32.xlu0 %v838
  %v840 = vpop.xlane.xlu0 %839
  %v841 = vrot.slane %v840, 4
  %v842 = vadd.f32 %v840, %v841
  %v843 = vrot.slane %v842, 2
  %v844 = vadd.f32 %v842, %v843
  %v845 = vrot.slane %v844, 1
  %v846 = vadd.f32 %v844, %v845
  %s847 = vtos %v846
  %v848 = vstv %s847
  %849 = vst [vmem:[%s4] sm:$0xff] %v848
  // Predicated region
  $region18: #{ssim_pallas.1} parent=0 // pred_check
    _
  $region19: #{ssim_pallas.1} parent=0 // pred_check_branch
    %851 = sbr.rel (0) target = $region21
  $region20: #{ssim_pallas.1} parent=0 // pred_region
    _
  $region21: #{ssim_pallas.1} parent=0 // pred_fallthru
    _
  // Predicated region
  $region22: #{ssim_pallas.1} parent=0 // pred_check
    _
  $region23: #{ssim_pallas.1} parent=0 // pred_check_branch
    %853 = sbr.rel (0) target = $region25
  $region24: #{ssim_pallas.1} parent=0 // pred_region
    _
  $region25: #{ssim_pallas.1} parent=0 // pred_fallthru
    _

</llo_original>
